<compile_context>
chip_gen: v7x
topology: tpu7x:2x2x1
jax: 0.10.0
libtpu: 0.0.40
codegen_flags: <defaults>
</compile_context>

<pallas_src>
import itertools

import jax
import jax.numpy as jnp
import numpy as np
from jax.experimental import pallas as pl
from jax.experimental.pallas import tpu as pltpu


def _round_up(n, m):
    return ((n + m - 1) // m) * m


def _pick_tile(n):
    n8 = _round_up(max(n, 8), 8)
    if n8 <= 256:
        return n8          # one full-extent row block for small N
    return 256             # multiple row blocks -> megacore can split them


# ---------------------------------------------------------------------------
# Gate-matrix construction (glue, mirrors MCX.__init__); real 0/1 matrix.
# ---------------------------------------------------------------------------
def build_mcx_matrix(index=(0, 1), dim=2, wires=2, inverse=False):
    L = np.array(list(itertools.product(range(dim), repeat=wires)), dtype=np.int64)
    l2ns = L.copy()
    control_value = np.ones(L.shape[0], dtype=np.int64)
    for i in range(len(index) - 1):
        control_value = control_value * l2ns[:, index[i]]
    l2ns[:, index[-1]] = (control_value + l2ns[:, index[-1]]) % dim
    indices = np.all(L[:, None, :] == l2ns[None, :, :], axis=2)
    U = np.where(indices, 1.0, 0.0).astype(np.float32)
    if inverse:
        # conj of a real matrix is itself; the inverse is just the transpose.
        U = np.ascontiguousarray(U.T)
    return U


# ---------------------------------------------------------------------------
# Pallas kernel: row gather  y[base + r, :] = x[perm[base + r], :]
#   perm : SMEM (scalar prefetch), int32, one entry per (padded) output row
#   x    : VMEM, fully resident planar state (npad, cpad)
#   y    : VMEM, one row tile (tm, cpad) per grid step
# Destination rows are static (Python-unrolled); only the source row index
# is dynamic (pl.ds with a traced start), which is the documented pattern.
# ---------------------------------------------------------------------------
def _mcx_gather_kernel(perm_ref, x_ref, y_ref):
    tm = y_ref.shape[0]
    base = pl.program_id(0) * tm
    for r in range(tm):
        src = perm_ref[base + r]
        y_ref[pl.ds(r, 1), :] = x_ref[pl.ds(src, 1), :]


# ---------------------------------------------------------------------------
# Wrapper: complex64 state (N,) or (N, B)  ->  permuted complex64 state.
# ---------------------------------------------------------------------------
def mcx_apply(perm_padded, x, *, n, tm):
    squeeze = (x.ndim == 1)
    if squeeze:
        x = x[:, None]
    x = x.astype(jnp.complex64)
    npad = perm_padded.shape[0]
    b = x.shape[1]
    c = 2 * b
    cpad = _round_up(max(c, 128), 128)          # lane-dense output

    # Planar float32 state: [real | imag] along the lane axis -> (npad, cpad).
    x_planar = jnp.concatenate(
        [jnp.real(x).astype(jnp.float32), jnp.imag(x).astype(jnp.float32)],
        axis=1)
    x_p = jnp.pad(x_planar, ((0, npad - n), (0, cpad - c)))

    # VMEM footprint: resident x + (double-buffered) output tiles.  Only
    # raise the scoped limit above the conservative default when needed.
    need_bytes = (npad * cpad + 4 * tm * cpad) * 4 + (2 << 20)
    cp_kwargs = dict(dimension_semantics=("parallel",))
    if need_bytes > 16 * 1024 * 1024:
        cp_kwargs["vmem_limit_bytes"] = int(need_bytes)

    y_p = pl.pallas_call(
        _mcx_gather_kernel,
        out_shape=jax.ShapeDtypeStruct((npad, cpad), jnp.float32),
        grid_spec=pltpu.PrefetchScalarGridSpec(
            num_scalar_prefetch=1,
            grid=(npad // tm,),
            in_specs=[
                pl.BlockSpec((npad, cpad), lambda i, perm: (0, 0)),  # x resident
            ],
            out_specs=pl.BlockSpec((tm, cpad), lambda i, perm: (i, 0)),
        ),
        compiler_params=pltpu.CompilerParams(**cp_kwargs),
    )(perm_padded, x_p)

    y = jax.lax.complex(y_p[:n, :b], y_p[:n, b:c])
    return y[:, 0] if squeeze else y


# ---------------------------------------------------------------------------
# Module-style wrapper (forward == torch.matmul(self.U, x), U a permutation)
# ---------------------------------------------------------------------------
class MCX:
    def __init__(self, index=(0, 1), dim=2, wires=2, inverse=False):
        u_np = build_mcx_matrix(index=index, dim=dim, wires=wires,
                                inverse=inverse)
        self.n = u_np.shape[0]
        self.tm = _pick_tile(self.n)
        npad = _round_up(self.n, self.tm)
        perm = np.argmax(u_np, axis=1).astype(np.int32)     # one 1 per row
        self.perm_padded = jnp.asarray(np.pad(perm, (0, npad - self.n)))
        # complex64 buffer kept only for parity with the torch module /
        # the reference check below; it is never read by the kernel path.
        self.U = jnp.asarray(u_np.astype(np.complex64))

    def __call__(self, x):
        return mcx_apply(self.perm_padded, x, n=self.n, tm=self.tm)


if __name__ == "__main__":
    dim, wires = 2, 4              # qubits, 4 wires -> N = 16 (small demo)
    index = (0, 1)                 # control qudit 0, target qudit 1
    N = dim ** wires
    B = 4                          # small batch of state vectors (columns)

    key = jax.random.PRNGKey(0)
    kr, ki = jax.random.split(key)
    x = (jax.random.normal(kr, (N, B), dtype=jnp.float32)
         + 1j * jax.random.normal(ki, (N, B), dtype=jnp.float32)
         ).astype(jnp.complex64)

    gate = MCX(index=index, dim=dim, wires=wires)
    y = jax.block_until_ready(gate(x))

    # reference check against the module's literal semantics: U @ x
    y_ref = jnp.matmul(gate.U, x)
    np.testing.assert_allclose(np.asarray(y), np.asarray(y_ref),
                               rtol=1e-6, atol=1e-6)

    print("KERNEL_OK")
</pallas_src>

<mosaic_0001>
module attributes {stable_mosaic.version = 11 : i64} {
  func.func @_mcx_gather_kernel(%arg0: i32, %arg1: memref<16xi32, #tpu.memory_space<smem>>, %arg2: memref<16x128xf32, #tpu.memory_space<vmem>>, %arg3: memref<16x128xf32, #tpu.memory_space<vmem>>) attributes {dimension_semantics = [#tpu.dimension_semantics<parallel>], iteration_bounds = array<i64: 1>, scalar_prefetch = 1 : i64, scratch_operands = 0 : i64, tpu.core_type = #tpu.core_type<tc>, window_params = [{pipeline_mode = #tpu.pipeline_mode<synchronous>, transform_indices = @transform_0, window_bounds = array<i64: 16, 128>}, {transform_indices = @transform_1, window_bounds = array<i64: 16, 128>}]} {
    %c16_i32 = arith.constant 16 : i32
    %0 = arith.muli %arg0, %c16_i32 : i32
    %c0_i32 = arith.constant 0 : i32
    %1 = arith.addi %0, %c0_i32 : i32
    %2 = arith.index_cast %1 : i32 to index
    %3 = memref.load %arg1[%2] : memref<16xi32, #tpu.memory_space<smem>>
    %4 = arith.index_cast %3 : i32 to index
    %c0 = arith.constant 0 : index
    %5 = vector.load %arg2[%4, %c0] : memref<16x128xf32, #tpu.memory_space<vmem>>, vector<1x128xf32>
    %c0_0 = arith.constant 0 : index
    %c0_1 = arith.constant 0 : index
    %6 = vector.load %arg3[%c0_0, %c0_1] : memref<16x128xf32, #tpu.memory_space<vmem>>, vector<1x128xf32>
    tpu.vector_store %arg3[%c0_0, %c0_1], %5 {strides = array<i32>} : memref<16x128xf32, #tpu.memory_space<vmem>>, vector<1x128xf32>,
    %c1_i32 = arith.constant 1 : i32
    %7 = arith.addi %0, %c1_i32 : i32
    %8 = arith.index_cast %7 : i32 to index
    %9 = memref.load %arg1[%8] : memref<16xi32, #tpu.memory_space<smem>>
    %10 = arith.index_cast %9 : i32 to index
    %c0_2 = arith.constant 0 : index
    %11 = vector.load %arg2[%10, %c0_2] : memref<16x128xf32, #tpu.memory_space<vmem>>, vector<1x128xf32>
    %c1 = arith.constant 1 : index
    %c0_3 = arith.constant 0 : index
    %12 = vector.load %arg3[%c1, %c0_3] : memref<16x128xf32, #tpu.memory_space<vmem>>, vector<1x128xf32>
    tpu.vector_store %arg3[%c1, %c0_3], %11 {strides = array<i32>} : memref<16x128xf32, #tpu.memory_space<vmem>>, vector<1x128xf32>,
    %c2_i32 = arith.constant 2 : i32
    %13 = arith.addi %0, %c2_i32 : i32
    %14 = arith.index_cast %13 : i32 to index
    %15 = memref.load %arg1[%14] : memref<16xi32, #tpu.memory_space<smem>>
    %16 = arith.index_cast %15 : i32 to index
    %c0_4 = arith.constant 0 : index
    %17 = vector.load %arg2[%16, %c0_4] : memref<16x128xf32, #tpu.memory_space<vmem>>, vector<1x128xf32>
    %c2 = arith.constant 2 : index
    %c0_5 = arith.constant 0 : index
    %18 = vector.load %arg3[%c2, %c0_5] : memref<16x128xf32, #tpu.memory_space<vmem>>, vector<1x128xf32>
    tpu.vector_store %arg3[%c2, %c0_5], %17 {strides = array<i32>} : memref<16x128xf32, #tpu.memory_space<vmem>>, vector<1x128xf32>,
    %c3_i32 = arith.constant 3 : i32
    %19 = arith.addi %0, %c3_i32 : i32
    %20 = arith.index_cast %19 : i32 to index
    %21 = memref.load %arg1[%20] : memref<16xi32, #tpu.memory_space<smem>>
    %22 = arith.index_cast %21 : i32 to index
    %c0_6 = arith.constant 0 : index
    %23 = vector.load %arg2[%22, %c0_6] : memref<16x128xf32, #tpu.memory_space<vmem>>, vector<1x128xf32>
    %c3 = arith.constant 3 : index
    %c0_7 = arith.constant 0 : index
    %24 = vector.load %arg3[%c3, %c0_7] : memref<16x128xf32, #tpu.memory_space<vmem>>, vector<1x128xf32>
    tpu.vector_store %arg3[%c3, %c0_7], %23 {strides = array<i32>} : memref<16x128xf32, #tpu.memory_space<vmem>>, vector<1x128xf32>,
    %c4_i32 = arith.constant 4 : i32
    %25 = arith.addi %0, %c4_i32 : i32
    %26 = arith.index_cast %25 : i32 to index
    %27 = memref.load %arg1[%26] : memref<16xi32, #tpu.memory_space<smem>>
    %28 = arith.index_cast %27 : i32 to index
    %c0_8 = arith.constant 0 : index
    %29 = vector.load %arg2[%28, %c0_8] : memref<16x128xf32, #tpu.memory_space<vmem>>, vector<1x128xf32>
    %c4 = arith.constant 4 : index
    %c0_9 = arith.constant 0 : index
    %30 = vector.load %arg3[%c4, %c0_9] : memref<16x128xf32, #tpu.memory_space<vmem>>, vector<1x128xf32>
    tpu.vector_store %arg3[%c4, %c0_9], %29 {strides = array<i32>} : memref<16x128xf32, #tpu.memory_space<vmem>>, vector<1x128xf32>,
    %c5_i32 = arith.constant 5 : i32
    %31 = arith.addi %0, %c5_i32 : i32
    %32 = arith.index_cast %31 : i32 to index
    %33 = memref.load %arg1[%32] : memref<16xi32, #tpu.memory_space<smem>>
    %34 = arith.index_cast %33 : i32 to index
    %c0_10 = arith.constant 0 : index
    %35 = vector.load %arg2[%34, %c0_10] : memref<16x128xf32, #tpu.memory_space<vmem>>, vector<1x128xf32>
    %c5 = arith.constant 5 : index
    %c0_11 = arith.constant 0 : index
    %36 = vector.load %arg3[%c5, %c0_11] : memref<16x128xf32, #tpu.memory_space<vmem>>, vector<1x128xf32>
    tpu.vector_store %arg3[%c5, %c0_11], %35 {strides = array<i32>} : memref<16x128xf32, #tpu.memory_space<vmem>>, vector<1x128xf32>,
    %c6_i32 = arith.constant 6 : i32
    %37 = arith.addi %0, %c6_i32 : i32
    %38 = arith.index_cast %37 : i32 to index
    %39 = memref.load %arg1[%38] : memref<16xi32, #tpu.memory_space<smem>>
    %40 = arith.index_cast %39 : i32 to index
    %c0_12 = arith.constant 0 : index
    %41 = vector.load %arg2[%40, %c0_12] : memref<16x128xf32, #tpu.memory_space<vmem>>, vector<1x128xf32>
    %c6 = arith.constant 6 : index
    %c0_13 = arith.constant 0 : index
    %42 = vector.load %arg3[%c6, %c0_13] : memref<16x128xf32, #tpu.memory_space<vmem>>, vector<1x128xf32>
    tpu.vector_store %arg3[%c6, %c0_13], %41 {strides = array<i32>} : memref<16x128xf32, #tpu.memory_space<vmem>>, vector<1x128xf32>,
    %c7_i32 = arith.constant 7 : i32
    %43 = arith.addi %0, %c7_i32 : i32
    %44 = arith.index_cast %43 : i32 to index
    %45 = memref.load %arg1[%44] : memref<16xi32, #tpu.memory_space<smem>>
    %46 = arith.index_cast %45 : i32 to index
    %c0_14 = arith.constant 0 : index
    %47 = vector.load %arg2[%46, %c0_14] : memref<16x128xf32, #tpu.memory_space<vmem>>, vector<1x128xf32>
    %c7 = arith.constant 7 : index
    %c0_15 = arith.constant 0 : index
    %48 = vector.load %arg3[%c7, %c0_15] : memref<16x128xf32, #tpu.memory_space<vmem>>, vector<1x128xf32>
    tpu.vector_store %arg3[%c7, %c0_15], %47 {strides = array<i32>} : memref<16x128xf32, #tpu.memory_space<vmem>>, vector<1x128xf32>,
    %c8_i32 = arith.constant 8 : i32
    %49 = arith.addi %0, %c8_i32 : i32
    %50 = arith.index_cast %49 : i32 to index
    %51 = memref.load %arg1[%50] : memref<16xi32, #tpu.memory_space<smem>>
    %52 = arith.index_cast %51 : i32 to index
    %c0_16 = arith.constant 0 : index
    %53 = vector.load %arg2[%52, %c0_16] : memref<16x128xf32, #tpu.memory_space<vmem>>, vector<1x128xf32>
    %c8 = arith.constant 8 : index
    %c0_17 = arith.constant 0 : index
    %54 = vector.load %arg3[%c8, %c0_17] : memref<16x128xf32, #tpu.memory_space<vmem>>, vector<1x128xf32>
    tpu.vector_store %arg3[%c8, %c0_17], %53 {strides = array<i32>} : memref<16x128xf32, #tpu.memory_space<vmem>>, vector<1x128xf32>,
    %c9_i32 = arith.constant 9 : i32
    %55 = arith.addi %0, %c9_i32 : i32
    %56 = arith.index_cast %55 : i32 to index
    %57 = memref.load %arg1[%56] : memref<16xi32, #tpu.memory_space<smem>>
    %58 = arith.index_cast %57 : i32 to index
    %c0_18 = arith.constant 0 : index
    %59 = vector.load %arg2[%58, %c0_18] : memref<16x128xf32, #tpu.memory_space<vmem>>, vector<1x128xf32>
    %c9 = arith.constant 9 : index
    %c0_19 = arith.constant 0 : index
    %60 = vector.load %arg3[%c9, %c0_19] : memref<16x128xf32, #tpu.memory_space<vmem>>, vector<1x128xf32>
    tpu.vector_store %arg3[%c9, %c0_19], %59 {strides = array<i32>} : memref<16x128xf32, #tpu.memory_space<vmem>>, vector<1x128xf32>,
    %c10_i32 = arith.constant 10 : i32
    %61 = arith.addi %0, %c10_i32 : i32
    %62 = arith.index_cast %61 : i32 to index
    %63 = memref.load %arg1[%62] : memref<16xi32, #tpu.memory_space<smem>>
    %64 = arith.index_cast %63 : i32 to index
    %c0_20 = arith.constant 0 : index
    %65 = vector.load %arg2[%64, %c0_20] : memref<16x128xf32, #tpu.memory_space<vmem>>, vector<1x128xf32>
    %c10 = arith.constant 10 : index
    %c0_21 = arith.constant 0 : index
    %66 = vector.load %arg3[%c10, %c0_21] : memref<16x128xf32, #tpu.memory_space<vmem>>, vector<1x128xf32>
    tpu.vector_store %arg3[%c10, %c0_21], %65 {strides = array<i32>} : memref<16x128xf32, #tpu.memory_space<vmem>>, vector<1x128xf32>,
    %c11_i32 = arith.constant 11 : i32
    %67 = arith.addi %0, %c11_i32 : i32
    %68 = arith.index_cast %67 : i32 to index
    %69 = memref.load %arg1[%68] : memref<16xi32, #tpu.memory_space<smem>>
    %70 = arith.index_cast %69 : i32 to index
    %c0_22 = arith.constant 0 : index
    %71 = vector.load %arg2[%70, %c0_22] : memref<16x128xf32, #tpu.memory_space<vmem>>, vector<1x128xf32>
    %c11 = arith.constant 11 : index
    %c0_23 = arith.constant 0 : index
    %72 = vector.load %arg3[%c11, %c0_23] : memref<16x128xf32, #tpu.memory_space<vmem>>, vector<1x128xf32>
    tpu.vector_store %arg3[%c11, %c0_23], %71 {strides = array<i32>} : memref<16x128xf32, #tpu.memory_space<vmem>>, vector<1x128xf32>,
    %c12_i32 = arith.constant 12 : i32
    %73 = arith.addi %0, %c12_i32 : i32
    %74 = arith.index_cast %73 : i32 to index
    %75 = memref.load %arg1[%74] : memref<16xi32, #tpu.memory_space<smem>>
    %76 = arith.index_cast %75 : i32 to index
    %c0_24 = arith.constant 0 : index
    %77 = vector.load %arg2[%76, %c0_24] : memref<16x128xf32, #tpu.memory_space<vmem>>, vector<1x128xf32>
    %c12 = arith.constant 12 : index
    %c0_25 = arith.constant 0 : index
    %78 = vector.load %arg3[%c12, %c0_25] : memref<16x128xf32, #tpu.memory_space<vmem>>, vector<1x128xf32>
    tpu.vector_store %arg3[%c12, %c0_25], %77 {strides = array<i32>} : memref<16x128xf32, #tpu.memory_space<vmem>>, vector<1x128xf32>,
    %c13_i32 = arith.constant 13 : i32
    %79 = arith.addi %0, %c13_i32 : i32
    %80 = arith.index_cast %79 : i32 to index
    %81 = memref.load %arg1[%80] : memref<16xi32, #tpu.memory_space<smem>>
    %82 = arith.index_cast %81 : i32 to index
    %c0_26 = arith.constant 0 : index
    %83 = vector.load %arg2[%82, %c0_26] : memref<16x128xf32, #tpu.memory_space<vmem>>, vector<1x128xf32>
    %c13 = arith.constant 13 : index
    %c0_27 = arith.constant 0 : index
    %84 = vector.load %arg3[%c13, %c0_27] : memref<16x128xf32, #tpu.memory_space<vmem>>, vector<1x128xf32>
    tpu.vector_store %arg3[%c13, %c0_27], %83 {strides = array<i32>} : memref<16x128xf32, #tpu.memory_space<vmem>>, vector<1x128xf32>,
    %c14_i32 = arith.constant 14 : i32
    %85 = arith.addi %0, %c14_i32 : i32
    %86 = arith.index_cast %85 : i32 to index
    %87 = memref.load %arg1[%86] : memref<16xi32, #tpu.memory_space<smem>>
    %88 = arith.index_cast %87 : i32 to index
    %c0_28 = arith.constant 0 : index
    %89 = vector.load %arg2[%88, %c0_28] : memref<16x128xf32, #tpu.memory_space<vmem>>, vector<1x128xf32>
    %c14 = arith.constant 14 : index
    %c0_29 = arith.constant 0 : index
    %90 = vector.load %arg3[%c14, %c0_29] : memref<16x128xf32, #tpu.memory_space<vmem>>, vector<1x128xf32>
    tpu.vector_store %arg3[%c14, %c0_29], %89 {strides = array<i32>} : memref<16x128xf32, #tpu.memory_space<vmem>>, vector<1x128xf32>,
    %c15_i32 = arith.constant 15 : i32
    %91 = arith.addi %0, %c15_i32 : i32
    %92 = arith.index_cast %91 : i32 to index
    %93 = memref.load %arg1[%92] : memref<16xi32, #tpu.memory_space<smem>>
    %94 = arith.index_cast %93 : i32 to index
    %c0_30 = arith.constant 0 : index
    %95 = vector.load %arg2[%94, %c0_30] : memref<16x128xf32, #tpu.memory_space<vmem>>, vector<1x128xf32>
    %c15 = arith.constant 15 : index
    %c0_31 = arith.constant 0 : index
    %96 = vector.load %arg3[%c15, %c0_31] : memref<16x128xf32, #tpu.memory_space<vmem>>, vector<1x128xf32>
    tpu.vector_store %arg3[%c15, %c0_31], %95 {strides = array<i32>} : memref<16x128xf32, #tpu.memory_space<vmem>>, vector<1x128xf32>,
    return
  }
  func.func @transform_0(%arg0: i32, %arg1: memref<16xi32, #tpu.memory_space<smem>>) -> (i32, i32) {
    %c0_i32 = arith.constant 0 : i32
    %c0_i32_0 = arith.constant 0 : i32
    %c0_i32_1 = arith.constant 0 : i32
    return %c0_i32, %c0_i32_0 : i32, i32
  }
  func.func @transform_1(%arg0: i32, %arg1: memref<16xi32, #tpu.memory_space<smem>>) -> (i32, i32) {
    %c0_i32 = arith.constant 0 : i32
    %c0_i32_0 = arith.constant 0 : i32
    return %arg0, %c0_i32 : i32, i32
  }
}

</mosaic_0001>

<llo_original>
// kernel: tpu_custom_call.1
$region0: #{tpu_custom_call.1}
  #allocation0 [shape = 'u32[]', space=smem, size = 0x4, offset = 0x4, fixed_abs, tag = 'smem constant byte address 0x4 - core index']
  #allocation1 [shape = 'u32[144,128]{1,0:T(1,128)}', space=vmem, size = 0x12000, scoped, tag = 'internal scratch']
  #allocation2 [shape = 's32[1]{0}', space=sflag, size = 0x4, scoped, tag = 'scoped memory for tpu_custom_call.1']
  #allocation3 [shape = 'u8[512]{0}', space=smem, size = 0x200, scoped, tag = 'prefetched SMEM operand 0']
  %s0 = inlined_call_operand.hbm [shape: s32[16], index: 0, kind: input, shape index: {}]
  %s1 = inlined_call_operand.hbm [shape: f32[16,128], index: 1, kind: input, shape index: {}]
  %s2 = inlined_call_operand.hbm [shape: f32[16,128], index: 2, kind: output, shape index: {}]
  %s3 = sld [smem:[#allocation0]]
  $region18: #{tpu_custom_call.1} parent=0
    _
  %s5 = ssub.s32 1, %s3
  %s6 = scalar_select 0, %s5, %s3
  %8 = dma.hbm_to_smem %s0, 16, [#allocation3], [#allocation2]
  %9 = dma.done [#allocation2], 16
  %10 = sfence
  $region1: #{tpu_custom_call.1} parent=0
    #allocation4 [shape = 'u8[8192]{0}', space=vmem, size = 0x2000, scoped, tag = 'input window, operand 1, single buffered']
    #allocation5 [shape = 's32[1]{0}', space=sflag, size = 0x4, scoped, tag = 'scoped memory for tpu_custom_call.1']
    #allocation6 [shape = 's32[1]{0}', space=sflag, size = 0x4, scoped, tag = 'scoped memory for tpu_custom_call.1']
    #allocation7 [shape = 'u8[8192]{0}', space=vmem, size = 0x2000, scoped, tag = 'output window, operand 0, single buffered']
    %11 = vsyncpa [#allocation5], 0
    %12 = vsyncpa [#allocation6], 0
    // Predicated region
    $region2: #{tpu_custom_call.1} parent=1 // pred_check
      _
    $region3: #{tpu_custom_call.1} parent=1 // pred_check_branch
      %14 = sbr.rel (0) target = $region5
    $region4: #{tpu_custom_call.1} parent=1 // pred_region
      %s16 = ssub.s32 256, 256
      %17 = vsyncadd [#allocation5], %s16
      %s18 = sshll.u32 [#allocation4], 4
      %s19 = int_to_ptr.vmem [resolvable:$true] %s18
      %24 = dma.hbm_to_vmem [thread:$0]  %s1, 256, %s19, [#allocation5], 128, 128, 8
    $region5: #{tpu_custom_call.1} parent=1 // pred_fallthru
      _
    // Predicated region
    $region6: #{tpu_custom_call.1} parent=1 // pred_check
      _
    $region7: #{tpu_custom_call.1} parent=1 // pred_check_branch
      %26 = sbr.rel (0) target = $region9
    $region8: #{tpu_custom_call.1} parent=1 // pred_region
      %27 = dma.done [#allocation5], 256
    $region9: #{tpu_custom_call.1} parent=1 // pred_fallthru
      _
    %s28 = smul.u32 0, 16
    %s29 = sld [smem:[#allocation3 + %s28]]
    %s30 = scalar_lea.vmem [#allocation4], %s29
    %v31 = vld [vmem:[%s30] sm:$0x1]
    %32 = vst [vmem:[#allocation7] sm:$0x1] %v31
    %s33 = sadd.s32 %s28, 1
    %s34 = sld [smem:[#allocation3 + %s33]]
    %s35 = scalar_lea.vmem [#allocation4], %s34
    %v36 = vld [vmem:[%s35] sm:$0x1]
    %37 = vst [vmem:[#allocation7 + $0x1] sm:$0x1] %v36
    %s38 = sadd.s32 %s28, 2
    %s39 = sld [smem:[#allocation3 + %s38]]
    %s40 = scalar_lea.vmem [#allocation4], %s39
    %v41 = vld [vmem:[%s40] sm:$0x1]
    %42 = vst [vmem:[#allocation7 + $0x2] sm:$0x1] %v41
    %s43 = sadd.s32 %s28, 3
    %s44 = sld [smem:[#allocation3 + %s43]]
    %s45 = scalar_lea.vmem [#allocation4], %s44
    %v46 = vld [vmem:[%s45] sm:$0x1]
    %47 = vst [vmem:[#allocation7 + $0x3] sm:$0x1] %v46
    %s48 = sadd.s32 %s28, 4
    %s49 = sld [smem:[#allocation3 + %s48]]
    %s50 = scalar_lea.vmem [#allocation4], %s49
    %v51 = vld [vmem:[%s50] sm:$0x1]
    %52 = vst [vmem:[#allocation7 + $0x4] sm:$0x1] %v51
    %s53 = sadd.s32 %s28, 5
    %s54 = sld [smem:[#allocation3 + %s53]]
    %s55 = scalar_lea.vmem [#allocation4], %s54
    %v56 = vld [vmem:[%s55] sm:$0x1]
    %57 = vst [vmem:[#allocation7 + $0x5] sm:$0x1] %v56
    %s58 = sadd.s32 %s28, 6
    %s59 = sld [smem:[#allocation3 + %s58]]
    %s60 = scalar_lea.vmem [#allocation4], %s59
    %v61 = vld [vmem:[%s60] sm:$0x1]
    %62 = vst [vmem:[#allocation7 + $0x6] sm:$0x1] %v61
    %s63 = sadd.s32 %s28, 7
    %s64 = sld [smem:[#allocation3 + %s63]]
    %s65 = scalar_lea.vmem [#allocation4], %s64
    %v66 = vld [vmem:[%s65] sm:$0x1]
    %67 = vst [vmem:[#allocation7 + $0x7] sm:$0x1] %v66
    %s68 = sadd.s32 %s28, 8
    %s69 = sld [smem:[#allocation3 + %s68]]
    %s70 = scalar_lea.vmem [#allocation4], %s69
    %v71 = vld [vmem:[%s70] sm:$0x1]
    %72 = vst [vmem:[#allocation7 + $0x8] sm:$0x1] %v71
    %s73 = sadd.s32 %s28, 9
    %s74 = sld [smem:[#allocation3 + %s73]]
    %s75 = scalar_lea.vmem [#allocation4], %s74
    %v76 = vld [vmem:[%s75] sm:$0x1]
    %77 = vst [vmem:[#allocation7 + $0x9] sm:$0x1] %v76
    %s78 = sadd.s32 %s28, 10
    %s79 = sld [smem:[#allocation3 + %s78]]
    %s80 = scalar_lea.vmem [#allocation4], %s79
    %v81 = vld [vmem:[%s80] sm:$0x1]
    %82 = vst [vmem:[#allocation7 + $0xa] sm:$0x1] %v81
    %s83 = sadd.s32 %s28, 11
    %s84 = sld [smem:[#allocation3 + %s83]]
    %s85 = scalar_lea.vmem [#allocation4], %s84
    %v86 = vld [vmem:[%s85] sm:$0x1]
    %87 = vst [vmem:[#allocation7 + $0xb] sm:$0x1] %v86
    %s88 = sadd.s32 %s28, 12
    %s89 = sld [smem:[#allocation3 + %s88]]
    %s90 = scalar_lea.vmem [#allocation4], %s89
    %v91 = vld [vmem:[%s90] sm:$0x1]
    %92 = vst [vmem:[#allocation7 + $0xc] sm:$0x1] %v91
    %s93 = sadd.s32 %s28, 13
    %s94 = sld [smem:[#allocation3 + %s93]]
    %s95 = scalar_lea.vmem [#allocation4], %s94
    %v96 = vld [vmem:[%s95] sm:$0x1]
    %97 = vst [vmem:[#allocation7 + $0xd] sm:$0x1] %v96
    %s98 = sadd.s32 %s28, 14
    %s99 = sld [smem:[#allocation3 + %s98]]
    %s100 = scalar_lea.vmem [#allocation4], %s99
    %v101 = vld [vmem:[%s100] sm:$0x1]
    %102 = vst [vmem:[#allocation7 + $0xe] sm:$0x1] %v101
    %s103 = sadd.s32 %s28, 15
    %s104 = sld [smem:[#allocation3 + %s103]]
    %s105 = scalar_lea.vmem [#allocation4], %s104
    %v106 = vld [vmem:[%s105] sm:$0x1]
    %107 = vst [vmem:[#allocation7 + $0xf] sm:$0x1] %v106
    // Predicated region
    $region10: #{tpu_custom_call.1} parent=1 // pred_check
      _
    $region11: #{tpu_custom_call.1} parent=1 // pred_check_branch
      %109 = sbr.rel (0) target = $region13
    $region12: #{tpu_custom_call.1} parent=1 // pred_region
      %s111 = ssub.s32 256, 256
      %112 = vsyncadd [#allocation6], %s111
      %s113 = sshll.u32 [#allocation7], 4
      %s114 = int_to_ptr.vmem [resolvable:$true] %s113
      %119 = dma.vmem_to_hbm [thread:$0]  %s114, 256, %s2, [#allocation6], 128, 128, 8
    $region13: #{tpu_custom_call.1} parent=1 // pred_fallthru
      _
    // Predicated region
    $region14: #{tpu_custom_call.1} parent=1 // pred_check
      _
    $region15: #{tpu_custom_call.1} parent=1 // pred_check_branch
      %121 = sbr.rel (0) target = $region17
    $region16: #{tpu_custom_call.1} parent=1 // pred_region
      %122 = dma.done [#allocation6], 256
    $region17: #{tpu_custom_call.1} parent=1 // pred_fallthru
      _
    %123 = vsyncpa [#allocation5], 1
    %124 = vsyncpa [#allocation6], 1

</llo_original>
